<compile_context>
chip_gen: v7x
topology: tpu7x:2x2x1
jax: 0.10.0
libtpu: 0.0.40
codegen_flags: <defaults>
</compile_context>

<pallas_src>
import functools
import math

import jax
import jax.numpy as jnp
from jax.experimental import pallas as pl
from jax.experimental.pallas import tpu as pltpu


# ----------------------------------------------------------------------------
# helpers
# ----------------------------------------------------------------------------
def _round_up(x, m):
    return (x + m - 1) // m * m


def _pad2(a, rows, cols):
    """Zero-pad a 2-D array up to (rows, cols)."""
    return jnp.pad(a, ((0, rows - a.shape[0]), (0, cols - a.shape[1])))


def _pad_feature_dim(d, tiles_for_dim):
    """Pad a feature dim to a lane-dense multiple of 128; if it exceeds its
    tile size(s), pad further so every tile size used for this dim divides it."""
    d_p = _round_up(d, 128)
    if d_p > min(tiles_for_dim):
        d_p = _round_up(d_p, math.lcm(*tiles_for_dim))
    return d_p


def _select_tile_config(tiles=None, vmem_limit_bytes=None):
    """Per-generation default (TM, TN, TK) tiles + scoped-VMEM limit."""
    if tiles is not None:
        tm, tn, tk = tiles
        return tm, tn, tk, vmem_limit_bytes or (64 << 20)
    kind = ""
    try:
        kind = jax.devices()[0].device_kind.lower()
    except Exception:  # pragma: no cover - defensive, defaults are safe
        pass
    if "v7" in kind:
        # v7x: 64 MiB physical VMEM / 32 MiB scoped default; 2x256^2 MXU.
        return 256, 512, 512, 48 << 20
    if "v5" in kind:
        # v5e: 4x128^2 MXU -> 128-aligned tiles; raise the 16 MiB scoped default.
        return 256, 512, 512, 64 << 20
    # v6e (default): 128 MiB VMEM, 2x256^2 MXU.
    return 256, 512, 1024, 64 << 20


# ----------------------------------------------------------------------------
# kernel: one (tm, tn) output tile of  y = x @ W^T + b  (+ optional ReLU)
# ----------------------------------------------------------------------------
def _linear_relu_kernel(x_ref, w_ref, b_ref, o_ref, acc_ref, *, apply_relu):
    """Tiled linear with K-reduction grid.

    Grid = (M/tm, N/tn, K/tk), K innermost ("arbitrary").  The f32 VMEM
    accumulator is zeroed at k == 0; bias add (+ optional ReLU) and the store
    happen at the last K step.  Matmul operands are bf16, accumulation is f32.
    """
    k = pl.program_id(2)

    @pl.when(k == 0)
    def _():
        acc_ref[...] = jnp.zeros_like(acc_ref)

    acc_ref[...] += jnp.dot(x_ref[...], w_ref[...],
                            preferred_element_type=jnp.float32)

    @pl.when(k == pl.num_programs(2) - 1)
    def _():
        y = acc_ref[...] + b_ref[...]          # bias kept in f32
        if apply_relu:
            y = jnp.maximum(y, 0.0)
        o_ref[...] = y.astype(o_ref.dtype)


def _tiled_linear(x, w_t, bias_row, *, apply_relu, out_dtype,
                  tm, tn, tk, vmem_limit_bytes):
    """pallas_call wrapper for one layer.  `w_t` is pre-transposed to [K, N]."""
    m, k_dim = x.shape
    _, n = w_t.shape
    tm = min(tm, m)
    tn = min(tn, n)
    tk = min(tk, k_dim)
    grid = (m // tm, n // tn, k_dim // tk)

    return pl.pallas_call(
        functools.partial(_linear_relu_kernel, apply_relu=apply_relu),
        out_shape=jax.ShapeDtypeStruct((m, n), out_dtype),
        grid_spec=pltpu.PrefetchScalarGridSpec(
            num_scalar_prefetch=0,
            grid=grid,
            in_specs=[
                pl.BlockSpec((tm, tk), lambda i, j, kk: (i, kk)),   # x tile
                pl.BlockSpec((tk, tn), lambda i, j, kk: (kk, j)),   # W^T tile
                pl.BlockSpec((1, tn), lambda i, j, kk: (0, j)),     # bias row
            ],
            out_specs=pl.BlockSpec((tm, tn), lambda i, j, kk: (i, j)),
            scratch_shapes=[pltpu.VMEM((tm, tn), jnp.float32)],
        ),
        compiler_params=pltpu.CompilerParams(
            dimension_semantics=("parallel", "parallel", "arbitrary"),
            vmem_limit_bytes=vmem_limit_bytes,
        ),
    )(x, w_t, bias_row)


# ----------------------------------------------------------------------------
# one-time parameter prep (cache the result; do NOT call per forward)
# ----------------------------------------------------------------------------
def prepare_lora_mlp_params(params, *, alpha, rank,
                            compute_dtype=jnp.bfloat16,
                            tiles=None, vmem_limit_bytes=None):
    """Fold LoRA into the base weights (exact, f32), transpose to [K, N],
    zero-pad to lane/tile-friendly sizes, cast matmul operands to bf16."""
    tm, tn, tk, vmem = _select_tile_config(tiles, vmem_limit_bytes)
    scaling = float(alpha) / float(rank)

    w1 = params["w1"].astype(jnp.float32)
    w2 = params["w2"].astype(jnp.float32)
    w1_eff = w1 + scaling * (params["bb1"].astype(jnp.float32)
                             @ params["a1"].astype(jnp.float32))
    w2_eff = w2 + scaling * (params["bb2"].astype(jnp.float32)
                             @ params["a2"].astype(jnp.float32))

    hidden, in_f = w1.shape
    out_f, _ = w2.shape

    in_p = _pad_feature_dim(in_f, (tk,))           # K of layer 1
    hid_p = _pad_feature_dim(hidden, (tn, tk))     # N of layer 1 / K of layer 2
    out_p = _pad_feature_dim(out_f, (tn,))         # N of layer 2

    return {
        "w1t": _pad2(w1_eff.T, in_p, hid_p).astype(compute_dtype),
        "b1": _pad2(params["b1"].astype(jnp.float32).reshape(1, -1), 1, hid_p),
        "w2t": _pad2(w2_eff.T, hid_p, out_p).astype(compute_dtype),
        "b2": _pad2(params["b2"].astype(jnp.float32).reshape(1, -1), 1, out_p),
        "config": dict(tm=tm, tn=tn, tk=tk, vmem_limit_bytes=vmem,
                       compute_dtype=compute_dtype, out_features=out_f),
    }


# ----------------------------------------------------------------------------
# forward pass (LoRALinear -> ReLU -> LoRALinear)
# ----------------------------------------------------------------------------
def lora_mlp_forward(x, prepped):
    cfg = prepped["config"]
    tm, tn, tk = cfg["tm"], cfg["tn"], cfg["tk"]
    vmem = cfg["vmem_limit_bytes"]
    cdt = cfg["compute_dtype"]

    batch, in_f = x.shape
    in_p = prepped["w1t"].shape[0]

    tm_eff = min(tm, _round_up(batch, 8))
    b_p = _round_up(batch, tm_eff)

    # Zero padding is mathematically exact; result is sliced back below.
    # TODO(synk): at production batch sizes, pad once outside the hot path (or
    # handle the remainder tile in-kernel) to avoid this per-call pad.
    x_p = jnp.pad(x, ((0, b_p - batch), (0, in_p - in_f))).astype(cdt)

    h = _tiled_linear(x_p, prepped["w1t"], prepped["b1"],
                      apply_relu=True, out_dtype=cdt,
                      tm=tm_eff, tn=tn, tk=tk, vmem_limit_bytes=vmem)
    y = _tiled_linear(h, prepped["w2t"], prepped["b2"],
                      apply_relu=False, out_dtype=jnp.float32,
                      tm=tm_eff, tn=tn, tk=tk, vmem_limit_bytes=vmem)

    return y[:batch, :cfg["out_features"]]


# ----------------------------------------------------------------------------
# pure-JAX references
# ----------------------------------------------------------------------------
def _reference_forward_f32(x, params, *, alpha, rank):
    """Mirrors the PyTorch LoRAModel math exactly, in f32."""
    scaling = alpha / rank

    def layer(xx, w, b, a, bb):
        base = xx @ w.T + b
        lora = ((bb @ (a @ xx.T)).T) * scaling
        return base + lora

    h = jnp.maximum(
        layer(x, params["w1"], params["b1"], params["a1"], params["bb1"]), 0.0)
    return layer(h, params["w2"], params["b2"], params["a2"], params["bb2"])


def _reference_forward_bf16(x, params, *, alpha, rank):
    """Mirrors the kernel numerics: f32 LoRA fold, bf16 operands, f32 accumulate."""
    scaling = alpha / rank
    w1e = (params["w1"] + scaling * params["bb1"] @ params["a1"]).astype(jnp.bfloat16)
    w2e = (params["w2"] + scaling * params["bb2"] @ params["a2"]).astype(jnp.bfloat16)
    xb = x.astype(jnp.bfloat16)
    h = jnp.dot(xb, w1e.T, preferred_element_type=jnp.float32) + params["b1"]
    h = jnp.maximum(h, 0.0).astype(jnp.bfloat16)
    return jnp.dot(h, w2e.T, preferred_element_type=jnp.float32) + params["b2"]


# ----------------------------------------------------------------------------
# demo / self-test
# ----------------------------------------------------------------------------
if __name__ == "__main__":
    def make_params(key, in_f, hid, out_f, rank):
        ks = jax.random.split(key, 9)
        # NOTE: PyTorch inits lora_B to zeros (LoRA branch starts as a no-op);
        # here lora_B is nonzero so the LoRA fold is actually exercised.
        p = {
            "w1": jax.random.normal(ks[0], (hid, in_f), jnp.float32) * 0.1,
            "b1": jax.random.normal(ks[1], (hid,), jnp.float32) * 0.1,
            "a1": jax.random.normal(ks[2], (rank, in_f), jnp.float32) * 0.1,
            "bb1": jax.random.normal(ks[3], (hid, rank), jnp.float32) * 0.1,
            "w2": jax.random.normal(ks[4], (out_f, hid), jnp.float32) * 0.1,
            "b2": jax.random.normal(ks[5], (out_f,), jnp.float32) * 0.1,
            "a2": jax.random.normal(ks[6], (rank, hid), jnp.float32) * 0.1,
            "bb2": jax.random.normal(ks[7], (out_f, rank), jnp.float32) * 0.1,
        }
        return p, ks[8]

    key = jax.random.PRNGKey(0)

    configs = [
        # (batch, in, hidden, out, rank, alpha, tile override)
        (8, 32, 64, 32, 4, 1.0, None),                 # module-scale toy shapes
        (32, 256, 512, 192, 8, 2.0, (16, 128, 128)),   # forces multi-tile grid
    ]

    for (batch, in_f, hid, out_f, rank, alpha, tiles) in configs:
        key, sub = jax.random.split(key)
        params, xkey = make_params(sub, in_f, hid, out_f, rank)
        x = jax.random.normal(xkey, (batch, in_f), jnp.float32)

        # ONE-TIME prep, reused across calls (review item 1).
        prepped = prepare_lora_mlp_params(params, alpha=alpha, rank=rank,
                                          tiles=tiles)
        fwd = jax.jit(lambda xx, p=prepped: lora_mlp_forward(xx, p))

        out = jax.block_until_ready(fwd(x))
        assert out.shape == (batch, out_f)

        ref_bf16 = _reference_forward_bf16(x, params, alpha=alpha, rank=rank)
        ref_f32 = _reference_forward_f32(x, params, alpha=alpha, rank=rank)
        assert jnp.allclose(out, ref_bf16, atol=1e-2, rtol=1e-2), \
            "mismatch vs bf16-emulated reference"
        assert jnp.allclose(out, ref_f32, atol=1e-1, rtol=1e-1), \
            "mismatch vs f32 LoRA reference"

    print("KERNEL_OK")
</pallas_src>

<mosaic_0001>
module attributes {stable_mosaic.version = 11 : i64} {
  func.func @_linear_relu_kernel(%arg0: i32, %arg1: i32, %arg2: i32, %arg3: memref<8x128xbf16, #tpu.memory_space<vmem>>, %arg4: memref<128x128xbf16, #tpu.memory_space<vmem>>, %arg5: memref<1x128xf32, #tpu.memory_space<vmem>>, %arg6: memref<8x128xf32, #tpu.memory_space<vmem>>, %arg7: memref<8x128xf32, #tpu.memory_space<vmem>>) attributes {dimension_semantics = [#tpu.dimension_semantics<parallel>, #tpu.dimension_semantics<parallel>, #tpu.dimension_semantics<arbitrary>], iteration_bounds = array<i64: 1, 1, 1>, scalar_prefetch = 0 : i64, scratch_operands = 1 : i64, tpu.core_type = #tpu.core_type<tc>, window_params = [{transform_indices = @transform_0, window_bounds = array<i64: 8, 128>}, {transform_indices = @transform_1, window_bounds = array<i64: 128, 128>}, {transform_indices = @transform_2, window_bounds = array<i64: 1, 128>}, {transform_indices = @transform_3, window_bounds = array<i64: 8, 128>}]} {
    %c0_i32 = arith.constant 0 : i32
    %0 = arith.cmpi eq, %arg2, %c0_i32 : i32
    %1 = arith.extui %0 : i1 to i32
    %c0_i32_0 = arith.constant 0 : i32
    %2 = arith.cmpi ne, %1, %c0_i32_0 : i32
    scf.if %2 {
      %cst_10 = arith.constant 0.000000e+00 : f32
      %12 = vector.broadcast %cst_10 : f32 to vector<8x128xf32>
      %c0_11 = arith.constant 0 : index
      %c0_12 = arith.constant 0 : index
      %13 = vector.load %arg7[%c0_11, %c0_12] : memref<8x128xf32, #tpu.memory_space<vmem>>, vector<8x128xf32>
      tpu.vector_store %arg7[%c0_11, %c0_12], %12 {strides = array<i32>} : memref<8x128xf32, #tpu.memory_space<vmem>>, vector<8x128xf32>,
    } else {
    }
    %c0 = arith.constant 0 : index
    %c0_1 = arith.constant 0 : index
    %3 = vector.load %arg7[%c0, %c0_1] : memref<8x128xf32, #tpu.memory_space<vmem>>, vector<8x128xf32>
    %c0_2 = arith.constant 0 : index
    %c0_3 = arith.constant 0 : index
    %4 = vector.load %arg3[%c0_2, %c0_3] : memref<8x128xbf16, #tpu.memory_space<vmem>>, vector<8x128xbf16>
    %c0_4 = arith.constant 0 : index
    %c0_5 = arith.constant 0 : index
    %5 = vector.load %arg4[%c0_4, %c0_5] : memref<128x128xbf16, #tpu.memory_space<vmem>>, vector<128x128xbf16>
    %cst = arith.constant dense<0.000000e+00> : vector<8x128xf32>
    %6 = tpu.matmul %4, %5, %cst {dimension_numbers = #tpu.dot_dimension_numbers<[1], [0], [0], [1], [0, 0, 1, 1], [], []>} : vector<8x128xbf16>, vector<128x128xbf16>, vector<8x128xf32> -> vector<8x128xf32>
    %7 = arith.addf %3, %6 : vector<8x128xf32>
    %c0_6 = arith.constant 0 : index
    %c0_7 = arith.constant 0 : index
    %8 = vector.load %arg7[%c0_6, %c0_7] : memref<8x128xf32, #tpu.memory_space<vmem>>, vector<8x128xf32>
    tpu.vector_store %arg7[%c0_6, %c0_7], %7 {strides = array<i32>} : memref<8x128xf32, #tpu.memory_space<vmem>>, vector<8x128xf32>,
    %c0_i32_8 = arith.constant 0 : i32
    %9 = arith.cmpi eq, %arg2, %c0_i32_8 : i32
    %10 = arith.extui %9 : i1 to i32
    %c0_i32_9 = arith.constant 0 : i32
    %11 = arith.cmpi ne, %10, %c0_i32_9 : i32
    scf.if %11 {
      %c0_10 = arith.constant 0 : index
      %c0_11 = arith.constant 0 : index
      %12 = vector.load %arg7[%c0_10, %c0_11] : memref<8x128xf32, #tpu.memory_space<vmem>>, vector<8x128xf32>
      %c0_12 = arith.constant 0 : index
      %c0_13 = arith.constant 0 : index
      %13 = vector.load %arg5[%c0_12, %c0_13] : memref<1x128xf32, #tpu.memory_space<vmem>>, vector<1x128xf32>
      %14 = vector.broadcast %13 : vector<1x128xf32> to vector<8x128xf32>
      %15 = arith.addf %12, %14 : vector<8x128xf32>
      %c0_14 = arith.constant 0 : index
      %c0_15 = arith.constant 0 : index
      %16 = vector.load %arg6[%c0_14, %c0_15] : memref<8x128xf32, #tpu.memory_space<vmem>>, vector<8x128xf32>
      tpu.vector_store %arg6[%c0_14, %c0_15], %15 {strides = array<i32>} : memref<8x128xf32, #tpu.memory_space<vmem>>, vector<8x128xf32>,
    } else {
    }
    return
  }
  func.func @transform_0(%arg0: i32, %arg1: i32, %arg2: i32) -> (i32, i32) {
    %c0_i32 = arith.constant 0 : i32
    return %arg0, %arg2 : i32, i32
  }
  func.func @transform_1(%arg0: i32, %arg1: i32, %arg2: i32) -> (i32, i32) {
    %c0_i32 = arith.constant 0 : i32
    return %arg2, %arg1 : i32, i32
  }
  func.func @transform_2(%arg0: i32, %arg1: i32, %arg2: i32) -> (i32, i32) {
    %c0_i32 = arith.constant 0 : i32
    %c0_i32_0 = arith.constant 0 : i32
    return %c0_i32, %arg1 : i32, i32
  }
  func.func @transform_3(%arg0: i32, %arg1: i32, %arg2: i32) -> (i32, i32) {
    %c0_i32 = arith.constant 0 : i32
    return %arg0, %arg1 : i32, i32
  }
}

module attributes {stable_mosaic.version = 11 : i64} {
  func.func @_linear_relu_kernel(%arg0: i32, %arg1: i32, %arg2: i32, %arg3: memref<8x128xbf16, #tpu.memory_space<vmem>>, %arg4: memref<128x128xbf16, #tpu.memory_space<vmem>>, %arg5: memref<1x128xf32, #tpu.memory_space<vmem>>, %arg6: memref<8x128xbf16, #tpu.memory_space<vmem>>, %arg7: memref<8x128xf32, #tpu.memory_space<vmem>>) attributes {dimension_semantics = [#tpu.dimension_semantics<parallel>, #tpu.dimension_semantics<parallel>, #tpu.dimension_semantics<arbitrary>], iteration_bounds = array<i64: 1, 1, 1>, scalar_prefetch = 0 : i64, scratch_operands = 1 : i64, tpu.core_type = #tpu.core_type<tc>, window_params = [{transform_indices = @transform_0, window_bounds = array<i64: 8, 128>}, {transform_indices = @transform_1, window_bounds = array<i64: 128, 128>}, {transform_indices = @transform_2, window_bounds = array<i64: 1, 128>}, {transform_indices = @transform_3, window_bounds = array<i64: 8, 128>}]} {
    %c0_i32 = arith.constant 0 : i32
    %0 = arith.cmpi eq, %arg2, %c0_i32 : i32
    %1 = arith.extui %0 : i1 to i32
    %c0_i32_0 = arith.constant 0 : i32
    %2 = arith.cmpi ne, %1, %c0_i32_0 : i32
    scf.if %2 {
      %cst_10 = arith.constant 0.000000e+00 : f32
      %12 = vector.broadcast %cst_10 : f32 to vector<8x128xf32>
      %c0_11 = arith.constant 0 : index
      %c0_12 = arith.constant 0 : index
      %13 = vector.load %arg7[%c0_11, %c0_12] : memref<8x128xf32, #tpu.memory_space<vmem>>, vector<8x128xf32>
      tpu.vector_store %arg7[%c0_11, %c0_12], %12 {strides = array<i32>} : memref<8x128xf32, #tpu.memory_space<vmem>>, vector<8x128xf32>,
    } else {
    }
    %c0 = arith.constant 0 : index
    %c0_1 = arith.constant 0 : index
    %3 = vector.load %arg7[%c0, %c0_1] : memref<8x128xf32, #tpu.memory_space<vmem>>, vector<8x128xf32>
    %c0_2 = arith.constant 0 : index
    %c0_3 = arith.constant 0 : index
    %4 = vector.load %arg3[%c0_2, %c0_3] : memref<8x128xbf16, #tpu.memory_space<vmem>>, vector<8x128xbf16>
    %c0_4 = arith.constant 0 : index
    %c0_5 = arith.constant 0 : index
    %5 = vector.load %arg4[%c0_4, %c0_5] : memref<128x128xbf16, #tpu.memory_space<vmem>>, vector<128x128xbf16>
    %cst = arith.constant dense<0.000000e+00> : vector<8x128xf32>
    %6 = tpu.matmul %4, %5, %cst {dimension_numbers = #tpu.dot_dimension_numbers<[1], [0], [0], [1], [0, 0, 1, 1], [], []>} : vector<8x128xbf16>, vector<128x128xbf16>, vector<8x128xf32> -> vector<8x128xf32>
    %7 = arith.addf %3, %6 : vector<8x128xf32>
    %c0_6 = arith.constant 0 : index
    %c0_7 = arith.constant 0 : index
    %8 = vector.load %arg7[%c0_6, %c0_7] : memref<8x128xf32, #tpu.memory_space<vmem>>, vector<8x128xf32>
    tpu.vector_store %arg7[%c0_6, %c0_7], %7 {strides = array<i32>} : memref<8x128xf32, #tpu.memory_space<vmem>>, vector<8x128xf32>,
    %c0_i32_8 = arith.constant 0 : i32
    %9 = arith.cmpi eq, %arg2, %c0_i32_8 : i32
    %10 = arith.extui %9 : i1 to i32
    %c0_i32_9 = arith.constant 0 : i32
    %11 = arith.cmpi ne, %10, %c0_i32_9 : i32
    scf.if %11 {
      %c0_10 = arith.constant 0 : index
      %c0_11 = arith.constant 0 : index
      %12 = vector.load %arg7[%c0_10, %c0_11] : memref<8x128xf32, #tpu.memory_space<vmem>>, vector<8x128xf32>
      %c0_12 = arith.constant 0 : index
      %c0_13 = arith.constant 0 : index
      %13 = vector.load %arg5[%c0_12, %c0_13] : memref<1x128xf32, #tpu.memory_space<vmem>>, vector<1x128xf32>
      %14 = vector.broadcast %13 : vector<1x128xf32> to vector<8x128xf32>
      %15 = arith.addf %12, %14 : vector<8x128xf32>
      %cst_14 = arith.constant 0.000000e+00 : f32
      %16 = vector.broadcast %cst_14 : f32 to vector<8x128xf32>
      %17 = arith.maximumf %15, %16 : vector<8x128xf32>
      %18 = arith.truncf %17 : vector<8x128xf32> to vector<8x128xbf16>
      %c0_15 = arith.constant 0 : index
      %c0_16 = arith.constant 0 : index
      %19 = vector.load %arg6[%c0_15, %c0_16] : memref<8x128xbf16, #tpu.memory_space<vmem>>, vector<8x128xbf16>
      tpu.vector_store %arg6[%c0_15, %c0_16], %18 {strides = array<i32>} : memref<8x128xbf16, #tpu.memory_space<vmem>>, vector<8x128xbf16>,
    } else {
    }
    return
  }
  func.func @transform_0(%arg0: i32, %arg1: i32, %arg2: i32) -> (i32, i32) {
    %c0_i32 = arith.constant 0 : i32
    return %arg0, %arg2 : i32, i32
  }
  func.func @transform_1(%arg0: i32, %arg1: i32, %arg2: i32) -> (i32, i32) {
    %c0_i32 = arith.constant 0 : i32
    return %arg2, %arg1 : i32, i32
  }
  func.func @transform_2(%arg0: i32, %arg1: i32, %arg2: i32) -> (i32, i32) {
    %c0_i32 = arith.constant 0 : i32
    %c0_i32_0 = arith.constant 0 : i32
    return %c0_i32, %arg1 : i32, i32
  }
  func.func @transform_3(%arg0: i32, %arg1: i32, %arg2: i32) -> (i32, i32) {
    %c0_i32 = arith.constant 0 : i32
    return %arg0, %arg1 : i32, i32
  }
}

</mosaic_0001>

<llo_original>
// kernel: _lambda_.3
$region0: #{_lambda_.3}
  #allocation0 [shape = 'u32[]', space=smem, size = 0x4, offset = 0x4, fixed_abs, tag = 'smem constant byte address 0x4 - core index']
  #allocation1 [shape = 'u32[144,128]{1,0:T(1,128)}', space=vmem, size = 0x12000, scoped, tag = 'internal scratch']
  #allocation2 [shape = 'f32[8,128]{1,0:T(8,128)}', space=vmem, size = 0x1000, scoped, tag = 'scratch operand']
  %s0 = inlined_call_operand.hbm [shape: bf16[8,128], index: 0, kind: input, shape index: {}]
  %s1 = inlined_call_operand.hbm [shape: bf16[128,128], index: 1, kind: input, shape index: {}]
  %s2 = inlined_call_operand.hbm [shape: f32[1,128], index: 2, kind: input, shape index: {}]
  %s3 = inlined_call_operand.hbm [shape: f32[8,128], index: 3, kind: output, shape index: {}]
  %s4 = sld [smem:[#allocation0]]
  $region42: #{_lambda_.3} parent=0
    _
  %s6 = ssub.s32 1, %s4
  %s7 = scalar_select 0, %s6, %s4
  $region1: #{_lambda_.3} parent=0
    #allocation3 [shape = 'u8[2048]{0}', space=vmem, size = 0x800, scoped, tag = 'input window, operand 0, single buffered']
    #allocation4 [shape = 's32[1]{0}', space=sflag, size = 0x4, scoped, tag = 'scoped memory for _lambda_.3']
    #allocation5 [shape = 's32[1]{0}', space=sflag, size = 0x4, scoped, tag = 'scoped memory for _lambda_.3']
    #allocation6 [shape = 'u8[32768]{0}', space=vmem, size = 0x8000, scoped, tag = 'input window, operand 1, single buffered']
    #allocation7 [shape = 's32[1]{0}', space=sflag, size = 0x4, scoped, tag = 'scoped memory for _lambda_.3']
    #allocation8 [shape = 'u8[512]{0}', space=vmem, size = 0x400, scoped, tag = 'input window, operand 2, single buffered']
    #allocation9 [shape = 'u8[4096]{0}', space=vmem, size = 0x1000, scoped, tag = 'output window, operand 0, single buffered']
    %8 = vsyncpa [#allocation4], 0
    %9 = vsyncpa [#allocation7], 0
    %10 = vsyncpa [#allocation5], 0
    // Predicated region
    $region2: #{_lambda_.3} parent=1 // pred_check
      _
    $region3: #{_lambda_.3} parent=1 // pred_check_branch
      %12 = sbr.rel (0) target = $region5
    $region4: #{_lambda_.3} parent=1 // pred_region
      %s14 = ssub.s32 64, 64
      %15 = vsyncadd [#allocation4], %s14
      %s17 = sshll.u32 [#allocation3], 4
      %s18 = int_to_ptr.vmem [resolvable:$true] %s17
      %20 = dma.hbm_to_vmem [thread:$0]  %s0, 64, %s18, [#allocation4]
    $region5: #{_lambda_.3} parent=1 // pred_fallthru
      _
    // Predicated region
    $region6: #{_lambda_.3} parent=1 // pred_check
      _
    $region7: #{_lambda_.3} parent=1 // pred_check_branch
      %22 = sbr.rel (0) target = $region9
    $region8: #{_lambda_.3} parent=1 // pred_region
      %s24 = ssub.s32 1024, 1024
      %25 = vsyncadd [#allocation7], %s24
      %s26 = sshll.u32 [#allocation6], 4
      %s27 = int_to_ptr.vmem [resolvable:$true] %s26
      %32 = dma.hbm_to_vmem [thread:$0]  %s1, 1024, %s27, [#allocation7], 64, 64, 4
    $region9: #{_lambda_.3} parent=1 // pred_fallthru
      _
    // Predicated region
    $region10: #{_lambda_.3} parent=1 // pred_check
      _
    $region11: #{_lambda_.3} parent=1 // pred_check_branch
      %34 = sbr.rel (0) target = $region13
    $region12: #{_lambda_.3} parent=1 // pred_region
      %s36 = ssub.s32 16, 16
      %37 = vsyncadd [#allocation7], %s36
      %s39 = sshll.u32 [#allocation8], 4
      %s40 = int_to_ptr.vmem [resolvable:$true] %s39
      %42 = dma.hbm_to_vmem [thread:$0]  %s2, 16, %s40, [#allocation7]
    $region13: #{_lambda_.3} parent=1 // pred_fallthru
      _
    // Predicated region
    $region14: #{_lambda_.3} parent=1 // pred_check
      _
    $region15: #{_lambda_.3} parent=1 // pred_check_branch
      %44 = sbr.rel (0) target = $region17
    $region16: #{_lambda_.3} parent=1 // pred_region
      %45 = dma.done [#allocation4], 64
    $region17: #{_lambda_.3} parent=1 // pred_fallthru
      _
    // Predicated region
    $region18: #{_lambda_.3} parent=1 // pred_check
      _
    $region19: #{_lambda_.3} parent=1 // pred_check_branch
      %47 = sbr.rel (0) target = $region21
    $region20: #{_lambda_.3} parent=1 // pred_region
      %48 = dma.done [#allocation7], 1024
    $region21: #{_lambda_.3} parent=1 // pred_fallthru
      _
    // Predicated region
    $region22: #{_lambda_.3} parent=1 // pred_check
      _
    $region23: #{_lambda_.3} parent=1 // pred_check_branch
      %50 = sbr.rel (0) target = $region25
    $region24: #{_lambda_.3} parent=1 // pred_region
      %51 = dma.done [#allocation7], 16
    $region25: #{_lambda_.3} parent=1 // pred_fallthru
      _
    %p53 = scmp.eq.s32.totalorder 0, 0
    // Predicated region
    $region26: #{_lambda_.3} parent=1 // pred_check
      %p54 = pneg %p53
    $region27: #{_lambda_.3} parent=1 // pred_check_branch
      %56 = sbr.rel (%p54) target = $region29
    $region28: #{_lambda_.3} parent=1 // pred_region
      %57 = vst [vmem:[#allocation2] sm:$0xff] 0.0
    $region29: #{_lambda_.3} parent=1 // pred_fallthru
      _
    %v58 = vld [vmem:[#allocation2] sm:$0xff]
    %v59 = vld [vmem:[#allocation3] sm:$0xf]
    %v60 = vld [vmem:[#allocation6] sm:$0xf]
    %v61 = vld [vmem:[#allocation6 + $0x4] sm:$0xf]
    %v62 = vld [vmem:[#allocation6 + $0x8] sm:$0xf]
    %v63 = vld [vmem:[#allocation6 + $0xc] sm:$0xf]
    %v64 = vld [vmem:[#allocation6 + $0x10] sm:$0xf]
    %v65 = vld [vmem:[#allocation6 + $0x14] sm:$0xf]
    %v66 = vld [vmem:[#allocation6 + $0x18] sm:$0xf]
    %v67 = vld [vmem:[#allocation6 + $0x1c] sm:$0xf]
    %v68 = vld [vmem:[#allocation6 + $0x20] sm:$0xf]
    %v69 = vld [vmem:[#allocation6 + $0x24] sm:$0xf]
    %v70 = vld [vmem:[#allocation6 + $0x28] sm:$0xf]
    %v71 = vld [vmem:[#allocation6 + $0x2c] sm:$0xf]
    %v72 = vld [vmem:[#allocation6 + $0x30] sm:$0xf]
    %v73 = vld [vmem:[#allocation6 + $0x34] sm:$0xf]
    %v74 = vld [vmem:[#allocation6 + $0x38] sm:$0xf]
    %v75 = vld [vmem:[#allocation6 + $0x3c] sm:$0xf]
    %v92 = vunpack.c.l.b16 %v60
    %v93 = vunpack.c.l.b16 %v61
    %v94 = vunpack.c.l.b16 %v62
    %v95 = vunpack.c.l.b16 %v63
    %v96 = vunpack.c.l.b16 %v64
    %v97 = vunpack.c.l.b16 %v65
    %v98 = vunpack.c.l.b16 %v66
    %v99 = vunpack.c.l.b16 %v67
    %v100 = vunpack.c.l.b16 %v68
    %v101 = vunpack.c.l.b16 %v69
    %v102 = vunpack.c.l.b16 %v70
    %v103 = vunpack.c.l.b16 %v71
    %v104 = vunpack.c.l.b16 %v72
    %v105 = vunpack.c.l.b16 %v73
    %v106 = vunpack.c.l.b16 %v74
    %v107 = vunpack.c.l.b16 %v75
    %v108 = vpack.c.b16 %v93, %v92
    %v109 = vpack.c.b16 %v95, %v94
    %v110 = vpack.c.b16 %v97, %v96
    %v111 = vpack.c.b16 %v99, %v98
    %v112 = vpack.c.b16 %v101, %v100
    %v113 = vpack.c.b16 %v103, %v102
    %v114 = vpack.c.b16 %v105, %v104
    %v115 = vpack.c.b16 %v107, %v106
    %124 = vmatprep.subr.bf16.mxu0 0
    %125 = vmatpush1.bf16.msra.mxu0 %v108
    %126 = vmatprep.subr.bf16.mxu0 0
    %127 = vmatpush1.bf16.msra.mxu0 %v109
    %128 = vmatprep.subr.bf16.mxu0 0
    %129 = vmatpush1.bf16.msra.mxu0 %v110
    %130 = vmatprep.subr.bf16.mxu0 0
    %131 = vmatpush1.bf16.msra.mxu0 %v111
    %132 = vmatprep.subr.bf16.mxu0 0
    %133 = vmatpush1.bf16.msra.mxu0 %v112
    %134 = vmatprep.subr.bf16.mxu0 0
    %135 = vmatpush1.bf16.msra.mxu0 %v113
    %136 = vmatprep.subr.bf16.mxu0 0
    %137 = vmatpush1.bf16.msra.mxu0 %v114
    %138 = vmatprep.subr.bf16.mxu0 0
    %139 = vmatpush1.bf16.msra.mxu0 %v115
    %140 = vmatprep.subr.bf16.mxu0 0
    %141 = vmatpush1.bf16.msra.mxu0 0
    %142 = vmatprep.subr.bf16.mxu0 0
    %143 = vmatpush1.bf16.msra.mxu0 0
    %144 = vmatprep.subr.bf16.mxu0 0
    %145 = vmatpush1.bf16.msra.mxu0 0
    %146 = vmatprep.subr.bf16.mxu0 0
    %147 = vmatpush1.bf16.msra.mxu0 0
    %148 = vmatprep.subr.bf16.mxu0 0
    %149 = vmatpush1.bf16.msra.mxu0 0
    %150 = vmatprep.subr.bf16.mxu0 0
    %151 = vmatpush1.bf16.msra.mxu0 0
    %152 = vmatprep.subr.bf16.mxu0 0
    %153 = vmatpush1.bf16.msra.mxu0 0
    %154 = vmatprep.subr.bf16.mxu0 0
    %155 = vmatpush1.bf16.msra.mxu0 0
    %156 = vmatprep.mubr.bf16.mxu0 0
    %157 = vmatmul.mubr.bf16.gmra.mrb[0].mxu0 %v59
    %v158 = vpop.f32.mrb[0].mxu0
    %v159 = vadd.f32 0.0, %v158
    %v160 = vpop.f32.mrb[0].mxu0
    %v161 = vpop.f32.mrb[0].mxu0
    %v162 = vpop.f32.mrb[0].mxu0
    %163 = vdwg.mxu0
    %v164 = vadd.f32 %v58, %v159
    %165 = vst [vmem:[#allocation2] sm:$0xff] %v164
    // Predicated region
    $region30: #{_lambda_.3} parent=1 // pred_check
      %p166 = pneg %p53
    $region31: #{_lambda_.3} parent=1 // pred_check_branch
      %168 = sbr.rel (%p166) target = $region33
    $region32: #{_lambda_.3} parent=1 // pred_region
      %v169 = vld [vmem:[#allocation2] sm:$0xff]
      %v170 = vld [vmem:[#allocation8] sm:$0x1]
      %v172 = vlaneseq
      %v173 = vshrl.u32 %v172, 7
      %v174 = vsub.s32 0, %v173
      %v175 = vrot.slane %v170, %v174
      %v177 = vadd.f32 %v169, %v175
      %178 = vst [vmem:[#allocation9] sm:$0xff] %v177
    $region33: #{_lambda_.3} parent=1 // pred_fallthru
      _
    // Predicated region
    $region34: #{_lambda_.3} parent=1 // pred_check
      _
    $region35: #{_lambda_.3} parent=1 // pred_check_branch
      %180 = sbr.rel (0) target = $region37
    $region36: #{_lambda_.3} parent=1 // pred_region
      %s182 = ssub.s32 128, 128
      %183 = vsyncadd [#allocation5], %s182
      %s185 = sshll.u32 [#allocation9], 4
      %s186 = int_to_ptr.vmem [resolvable:$true] %s185
      %188 = dma.vmem_to_hbm [thread:$0]  %s186, 128, %s3, [#allocation5]
    $region37: #{_lambda_.3} parent=1 // pred_fallthru
      _
    // Predicated region
    $region38: #{_lambda_.3} parent=1 // pred_check
      _
    $region39: #{_lambda_.3} parent=1 // pred_check_branch
      %190 = sbr.rel (0) target = $region41
    $region40: #{_lambda_.3} parent=1 // pred_region
      %191 = dma.done [#allocation5], 128
    $region41: #{_lambda_.3} parent=1 // pred_fallthru
      _
    %192 = vsyncpa [#allocation4], 1
    %193 = vsyncpa [#allocation7], 1
    %194 = vsyncpa [#allocation5], 1

// kernel: _lambda_.2
$region0: #{_lambda_.2}
  #allocation0 [shape = 'u32[]', space=smem, size = 0x4, offset = 0x4, fixed_abs, tag = 'smem constant byte address 0x4 - core index']
  #allocation1 [shape = 'u32[144,128]{1,0:T(1,128)}', space=vmem, size = 0x12000, scoped, tag = 'internal scratch']
  #allocation2 [shape = 'f32[8,128]{1,0:T(8,128)}', space=vmem, size = 0x1000, scoped, tag = 'scratch operand']
  %s0 = inlined_call_operand.hbm [shape: bf16[8,128], index: 0, kind: input, shape index: {}]
  %s1 = inlined_call_operand.hbm [shape: bf16[128,128], index: 1, kind: input, shape index: {}]
  %s2 = inlined_call_operand.hbm [shape: f32[1,128], index: 2, kind: input, shape index: {}]
  %s3 = inlined_call_operand.hbm [shape: bf16[8,128], index: 3, kind: output, shape index: {}]
  %s4 = sld [smem:[#allocation0]]
  $region42: #{_lambda_.2} parent=0
    _
  %s6 = ssub.s32 1, %s4
  %s7 = scalar_select 0, %s6, %s4
  $region1: #{_lambda_.2} parent=0
    #allocation3 [shape = 'u8[2048]{0}', space=vmem, size = 0x800, scoped, tag = 'input window, operand 0, single buffered']
    #allocation4 [shape = 's32[1]{0}', space=sflag, size = 0x4, scoped, tag = 'scoped memory for _lambda_.2']
    #allocation5 [shape = 's32[1]{0}', space=sflag, size = 0x4, scoped, tag = 'scoped memory for _lambda_.2']
    #allocation6 [shape = 'u8[32768]{0}', space=vmem, size = 0x8000, scoped, tag = 'input window, operand 1, single buffered']
    #allocation7 [shape = 's32[1]{0}', space=sflag, size = 0x4, scoped, tag = 'scoped memory for _lambda_.2']
    #allocation8 [shape = 'u8[512]{0}', space=vmem, size = 0x400, scoped, tag = 'input window, operand 2, single buffered']
    #allocation9 [shape = 'u8[2048]{0}', space=vmem, size = 0x800, scoped, tag = 'output window, operand 0, single buffered']
    %8 = vsyncpa [#allocation4], 0
    %9 = vsyncpa [#allocation7], 0
    %10 = vsyncpa [#allocation5], 0
    // Predicated region
    $region2: #{_lambda_.2} parent=1 // pred_check
      _
    $region3: #{_lambda_.2} parent=1 // pred_check_branch
      %12 = sbr.rel (0) target = $region5
    $region4: #{_lambda_.2} parent=1 // pred_region
      %s14 = ssub.s32 64, 64
      %15 = vsyncadd [#allocation4], %s14
      %s17 = sshll.u32 [#allocation3], 4
      %s18 = int_to_ptr.vmem [resolvable:$true] %s17
      %20 = dma.hbm_to_vmem [thread:$0]  %s0, 64, %s18, [#allocation4]
    $region5: #{_lambda_.2} parent=1 // pred_fallthru
      _
    // Predicated region
    $region6: #{_lambda_.2} parent=1 // pred_check
      _
    $region7: #{_lambda_.2} parent=1 // pred_check_branch
      %22 = sbr.rel (0) target = $region9
    $region8: #{_lambda_.2} parent=1 // pred_region
      %s24 = ssub.s32 1024, 1024
      %25 = vsyncadd [#allocation7], %s24
      %s26 = sshll.u32 [#allocation6], 4
      %s27 = int_to_ptr.vmem [resolvable:$true] %s26
      %32 = dma.hbm_to_vmem [thread:$0]  %s1, 1024, %s27, [#allocation7], 64, 64, 4
    $region9: #{_lambda_.2} parent=1 // pred_fallthru
      _
    // Predicated region
    $region10: #{_lambda_.2} parent=1 // pred_check
      _
    $region11: #{_lambda_.2} parent=1 // pred_check_branch
      %34 = sbr.rel (0) target = $region13
    $region12: #{_lambda_.2} parent=1 // pred_region
      %s36 = ssub.s32 16, 16
      %37 = vsyncadd [#allocation7], %s36
      %s39 = sshll.u32 [#allocation8], 4
      %s40 = int_to_ptr.vmem [resolvable:$true] %s39
      %42 = dma.hbm_to_vmem [thread:$0]  %s2, 16, %s40, [#allocation7]
    $region13: #{_lambda_.2} parent=1 // pred_fallthru
      _
    // Predicated region
    $region14: #{_lambda_.2} parent=1 // pred_check
      _
    $region15: #{_lambda_.2} parent=1 // pred_check_branch
      %44 = sbr.rel (0) target = $region17
    $region16: #{_lambda_.2} parent=1 // pred_region
      %45 = dma.done [#allocation4], 64
    $region17: #{_lambda_.2} parent=1 // pred_fallthru
      _
    // Predicated region
    $region18: #{_lambda_.2} parent=1 // pred_check
      _
    $region19: #{_lambda_.2} parent=1 // pred_check_branch
      %47 = sbr.rel (0) target = $region21
    $region20: #{_lambda_.2} parent=1 // pred_region
      %48 = dma.done [#allocation7], 1024
    $region21: #{_lambda_.2} parent=1 // pred_fallthru
      _
    // Predicated region
    $region22: #{_lambda_.2} parent=1 // pred_check
      _
    $region23: #{_lambda_.2} parent=1 // pred_check_branch
      %50 = sbr.rel (0) target = $region25
    $region24: #{_lambda_.2} parent=1 // pred_region
      %51 = dma.done [#allocation7], 16
    $region25: #{_lambda_.2} parent=1 // pred_fallthru
      _
    %p53 = scmp.eq.s32.totalorder 0, 0
    // Predicated region
    $region26: #{_lambda_.2} parent=1 // pred_check
      %p54 = pneg %p53
    $region27: #{_lambda_.2} parent=1 // pred_check_branch
      %56 = sbr.rel (%p54) target = $region29
    $region28: #{_lambda_.2} parent=1 // pred_region
      %57 = vst [vmem:[#allocation2] sm:$0xff] 0.0
    $region29: #{_lambda_.2} parent=1 // pred_fallthru
      _
    %v58 = vld [vmem:[#allocation2] sm:$0xff]
    %v59 = vld [vmem:[#allocation3] sm:$0xf]
    %v60 = vld [vmem:[#allocation6] sm:$0xf]
    %v61 = vld [vmem:[#allocation6 + $0x4] sm:$0xf]
    %v62 = vld [vmem:[#allocation6 + $0x8] sm:$0xf]
    %v63 = vld [vmem:[#allocation6 + $0xc] sm:$0xf]
    %v64 = vld [vmem:[#allocation6 + $0x10] sm:$0xf]
    %v65 = vld [vmem:[#allocation6 + $0x14] sm:$0xf]
    %v66 = vld [vmem:[#allocation6 + $0x18] sm:$0xf]
    %v67 = vld [vmem:[#allocation6 + $0x1c] sm:$0xf]
    %v68 = vld [vmem:[#allocation6 + $0x20] sm:$0xf]
    %v69 = vld [vmem:[#allocation6 + $0x24] sm:$0xf]
    %v70 = vld [vmem:[#allocation6 + $0x28] sm:$0xf]
    %v71 = vld [vmem:[#allocation6 + $0x2c] sm:$0xf]
    %v72 = vld [vmem:[#allocation6 + $0x30] sm:$0xf]
    %v73 = vld [vmem:[#allocation6 + $0x34] sm:$0xf]
    %v74 = vld [vmem:[#allocation6 + $0x38] sm:$0xf]
    %v75 = vld [vmem:[#allocation6 + $0x3c] sm:$0xf]
    %v92 = vunpack.c.l.b16 %v60
    %v93 = vunpack.c.l.b16 %v61
    %v94 = vunpack.c.l.b16 %v62
    %v95 = vunpack.c.l.b16 %v63
    %v96 = vunpack.c.l.b16 %v64
    %v97 = vunpack.c.l.b16 %v65
    %v98 = vunpack.c.l.b16 %v66
    %v99 = vunpack.c.l.b16 %v67
    %v100 = vunpack.c.l.b16 %v68
    %v101 = vunpack.c.l.b16 %v69
    %v102 = vunpack.c.l.b16 %v70
    %v103 = vunpack.c.l.b16 %v71
    %v104 = vunpack.c.l.b16 %v72
    %v105 = vunpack.c.l.b16 %v73
    %v106 = vunpack.c.l.b16 %v74
    %v107 = vunpack.c.l.b16 %v75
    %v108 = vpack.c.b16 %v93, %v92
    %v109 = vpack.c.b16 %v95, %v94
    %v110 = vpack.c.b16 %v97, %v96
    %v111 = vpack.c.b16 %v99, %v98
    %v112 = vpack.c.b16 %v101, %v100
    %v113 = vpack.c.b16 %v103, %v102
    %v114 = vpack.c.b16 %v105, %v104
    %v115 = vpack.c.b16 %v107, %v106
    %124 = vmatprep.subr.bf16.mxu0 0
    %125 = vmatpush1.bf16.msra.mxu0 %v108
    %126 = vmatprep.subr.bf16.mxu0 0
    %127 = vmatpush1.bf16.msra.mxu0 %v109
    %128 = vmatprep.subr.bf16.mxu0 0
    %129 = vmatpush1.bf16.msra.mxu0 %v110
    %130 = vmatprep.subr.bf16.mxu0 0
    %131 = vmatpush1.bf16.msra.mxu0 %v111
    %132 = vmatprep.subr.bf16.mxu0 0
    %133 = vmatpush1.bf16.msra.mxu0 %v112
    %134 = vmatprep.subr.bf16.mxu0 0
    %135 = vmatpush1.bf16.msra.mxu0 %v113
    %136 = vmatprep.subr.bf16.mxu0 0
    %137 = vmatpush1.bf16.msra.mxu0 %v114
    %138 = vmatprep.subr.bf16.mxu0 0
    %139 = vmatpush1.bf16.msra.mxu0 %v115
    %140 = vmatprep.subr.bf16.mxu0 0
    %141 = vmatpush1.bf16.msra.mxu0 0
    %142 = vmatprep.subr.bf16.mxu0 0
    %143 = vmatpush1.bf16.msra.mxu0 0
    %144 = vmatprep.subr.bf16.mxu0 0
    %145 = vmatpush1.bf16.msra.mxu0 0
    %146 = vmatprep.subr.bf16.mxu0 0
    %147 = vmatpush1.bf16.msra.mxu0 0
    %148 = vmatprep.subr.bf16.mxu0 0
    %149 = vmatpush1.bf16.msra.mxu0 0
    %150 = vmatprep.subr.bf16.mxu0 0
    %151 = vmatpush1.bf16.msra.mxu0 0
    %152 = vmatprep.subr.bf16.mxu0 0
    %153 = vmatpush1.bf16.msra.mxu0 0
    %154 = vmatprep.subr.bf16.mxu0 0
    %155 = vmatpush1.bf16.msra.mxu0 0
    %156 = vmatprep.mubr.bf16.mxu0 0
    %157 = vmatmul.mubr.bf16.gmra.mrb[0].mxu0 %v59
    %v158 = vpop.f32.mrb[0].mxu0
    %v159 = vadd.f32 0.0, %v158
    %v160 = vpop.f32.mrb[0].mxu0
    %v161 = vpop.f32.mrb[0].mxu0
    %v162 = vpop.f32.mrb[0].mxu0
    %163 = vdwg.mxu0
    %v164 = vadd.f32 %v58, %v159
    %165 = vst [vmem:[#allocation2] sm:$0xff] %v164
    // Predicated region
    $region30: #{_lambda_.2} parent=1 // pred_check
      %p166 = pneg %p53
    $region31: #{_lambda_.2} parent=1 // pred_check_branch
      %168 = sbr.rel (%p166) target = $region33
    $region32: #{_lambda_.2} parent=1 // pred_region
      %v169 = vld [vmem:[#allocation2] sm:$0xff]
      %v170 = vld [vmem:[#allocation8] sm:$0x1]
      %v172 = vlaneseq
      %v173 = vshrl.u32 %v172, 7
      %v174 = vsub.s32 0, %v173
      %v175 = vrot.slane %v170, %v174
      %v177 = vadd.f32 %v169, %v175
      %v178 = vmax.f32 %v177, 0.0
      %v179 = vpack.c.bf16 %v178, %v178
      %180 = vst [vmem:[#allocation9] sm:$0xf] %v179
    $region33: #{_lambda_.2} parent=1 // pred_fallthru
      _
    // Predicated region
    $region34: #{_lambda_.2} parent=1 // pred_check
      _
    $region35: #{_lambda_.2} parent=1 // pred_check_branch
      %182 = sbr.rel (0) target = $region37
    $region36: #{_lambda_.2} parent=1 // pred_region
      %s184 = ssub.s32 64, 64
      %185 = vsyncadd [#allocation5], %s184
      %s187 = sshll.u32 [#allocation9], 4
      %s188 = int_to_ptr.vmem [resolvable:$true] %s187
      %190 = dma.vmem_to_hbm [thread:$0]  %s188, 64, %s3, [#allocation5]
    $region37: #{_lambda_.2} parent=1 // pred_fallthru
      _
    // Predicated region
    $region38: #{_lambda_.2} parent=1 // pred_check
      _
    $region39: #{_lambda_.2} parent=1 // pred_check_branch
      %192 = sbr.rel (0) target = $region41
    $region40: #{_lambda_.2} parent=1 // pred_region
      %193 = dma.done [#allocation5], 64
    $region41: #{_lambda_.2} parent=1 // pred_fallthru
      _
    %194 = vsyncpa [#allocation4], 1
    %195 = vsyncpa [#allocation7], 1
    %196 = vsyncpa [#allocation5], 1

</llo_original>
